<compile_context>
chip_gen: v6e
topology: v6e:2x2x1
jax: 0.10.0
libtpu: 0.0.40
codegen_flags: <defaults>
</compile_context>

<pallas_src>
import jax
import jax.numpy as jnp
from jax.experimental import pallas as pl
from jax.experimental.pallas import tpu as pltpu


_VMEM_LIMIT = 32 * 1024 * 1024  # safe on v5e/v6e (128 MiB) and v7x (64 MiB)


# ----------------------------------------------------------------------------
# tiling helpers
# ----------------------------------------------------------------------------
def _pick_lane_tile(total, max_tile=4096):
    """Largest multiple of 128 that divides `total` and leaves >= 2 tiles."""
    cands = [t for t in range(128, min(max_tile, total // 2) + 1, 128)
             if total % t == 0]
    return max(cands) if cands else total


def _pick_row_tile(total, max_tile=16):
    """Largest multiple of 8 that divides `total` and leaves >= 2 tiles."""
    cands = [t for t in range(8, min(max_tile, total // 2) + 1, 8)
             if total % t == 0]
    return max(cands) if cands else total


# ----------------------------------------------------------------------------
# Kernel 1: pixel normalization  (x - mean) * (1/std)
# ----------------------------------------------------------------------------
def _normalize_kernel(x_ref, mean_ref, inv_std_ref, o_ref):
    # reciprocal of pixel_std precomputed in the wrapper (VPU has no divide)
    o_ref[...] = (x_ref[...] - mean_ref[...]) * inv_std_ref[...]


def normalize_images(images, pixel_mean, pixel_std):
    B, C, H, W = images.shape
    hw = H * W
    x = images.reshape(B * C, hw).astype(jnp.float32)
    # robust to pixel_mean/std arriving as (C,), (C,1,1), ...
    mean = jnp.tile(pixel_mean.reshape(-1).astype(jnp.float32), B).reshape(B * C, 1)
    inv_std = jnp.tile(1.0 / pixel_std.reshape(-1).astype(jnp.float32), B).reshape(B * C, 1)
    t = _pick_lane_tile(hw)
    out = pl.pallas_call(
        _normalize_kernel,
        out_shape=jax.ShapeDtypeStruct((B * C, hw), jnp.float32),
        grid=(hw // t,),
        in_specs=[
            pl.BlockSpec((B * C, t), lambda i: (0, i)),
            pl.BlockSpec((B * C, 1), lambda i: (0, 0)),
            pl.BlockSpec((B * C, 1), lambda i: (0, 0)),
        ],
        out_specs=pl.BlockSpec((B * C, t), lambda i: (0, i)),
        compiler_params=pltpu.CompilerParams(
            dimension_semantics=("parallel",),
            vmem_limit_bytes=_VMEM_LIMIT,
        ),
    )(x, mean, inv_std)
    return out.reshape(B, C, H, W)


# ----------------------------------------------------------------------------
# Bilinear interpolation matrix (PyTorch align_corners=False semantics)
# ----------------------------------------------------------------------------
def _bilinear_matrix(in_size, out_size):
    #   src = max((dst + 0.5) * in/out - 0.5, 0)
    scale = in_size / out_size
    dst = jnp.arange(out_size, dtype=jnp.float32)
    src = jnp.maximum((dst + 0.5) * scale - 0.5, 0.0)
    i0 = jnp.clip(jnp.floor(src).astype(jnp.int32), 0, in_size - 1)
    i1 = jnp.clip(i0 + 1, 0, in_size - 1)
    l1 = src - i0.astype(jnp.float32)
    l0 = 1.0 - l1
    rows = jnp.arange(out_size)
    M = jnp.zeros((out_size, in_size), jnp.float32)
    M = M.at[rows, i0].add(l0)
    M = M.at[rows, i1].add(l1)
    return M


# ----------------------------------------------------------------------------
# Kernel 2 (fused): bilinear upsample + sigmoid + semantic class mixing
#   per (image b, output-row-band i):
#     up[q]  = Wh_tile @ pred[q] @ Ww^T        (all Q masks, batched matmuls)
#     sig    = sigmoid(up)
#     sem[c] = sum_q softmax(cls)[q, c] * sig[q]
# ----------------------------------------------------------------------------
def _upsample_semantic_kernel(wh_ref, wwt_ref, pred_ref, cls_ref,
                              mask_ref, sem_ref, probs_ref):
    row_tile = pl.program_id(1)
    num_classes = cls_ref.shape[2] - 1

    # Hoisted softmax: once per image (row-tile axis is "arbitrary" =>
    # sequential per image); stored in VMEM scratch as bf16.
    @pl.when(row_tile == 0)
    def _():
        logits = cls_ref[0]                                          # (Q, C+1)
        m = jnp.max(logits, axis=-1, keepdims=True)
        e = jnp.exp(logits - m)
        p = e * pl.reciprocal(jnp.sum(e, axis=-1, keepdims=True), approx=True)
        probs_ref[...] = p[:, :num_classes].astype(jnp.bfloat16)     # drop no-object

    pred = pred_ref[0]                                               # (Q, h, w) f32
    q_num, h_in, w_in = pred.shape
    th = wh_ref.shape[0]
    w_out = wwt_ref.shape[1]

    # ---- bilinear upsample of this TH-row band, batched over all Q masks ----
    # rows: contract h (batched matmul over Q on the MXU)
    wh_b = jnp.broadcast_to(wh_ref[...][None, :, :], (q_num, th, h_in))
    up_h = jnp.einsum('qth,qhw->qtw', wh_b, pred,
                      preferred_element_type=jnp.float32)            # (Q, TH, w)
    # cols: contract w as one 2-D matmul with M = Q*TH
    up = jnp.dot(up_h.reshape(q_num * th, w_in), wwt_ref[...],
                 preferred_element_type=jnp.float32)                 # (Q*TH, W)
    up = up.reshape(q_num, th, w_out)                                # (Q, TH, W)
    mask_ref[0] = up

    # ---- semantic inference on this band ----
    # sigmoid = 1 / (1 + exp(-x)): exp on the EUP + approximate reciprocal
    sig = pl.reciprocal(1.0 + jnp.exp(-up), approx=True).astype(jnp.bfloat16)
    probs = probs_ref[...]                                           # (Q, C) bf16
    for t in range(th):   # static unroll; TH kept small by the wrapper
        sem_ref[0, :, t, :] = jax.lax.dot_general(
            probs, sig[:, t, :], (((0,), (0,)), ((), ())),
            preferred_element_type=jnp.float32)                      # (C, W)


def upsample_and_semantic_inference(mask_cls, mask_pred, h_out, w_out):
    """Fused F.interpolate(bilinear, align_corners=False) + semantic_inference.

    Returns (mask_pred_results (B, Q, H, W), sem_seg (B, num_classes, H, W)).
    """
    B, Q, Cp1 = mask_cls.shape
    _, _, h_in, w_in = mask_pred.shape
    C = Cp1 - 1

    wh = _bilinear_matrix(h_in, h_out)         # (H, h)
    wwt = _bilinear_matrix(w_in, w_out).T      # (w, W)

    th = _pick_row_tile(h_out)
    grid = (B, h_out // th)

    mask_up, sem = pl.pallas_call(
        _upsample_semantic_kernel,
        out_shape=(
            jax.ShapeDtypeStruct((B, Q, h_out, w_out), jnp.float32),
            jax.ShapeDtypeStruct((B, C, h_out, w_out), jnp.float32),
        ),
        grid=grid,
        in_specs=[
            pl.BlockSpec((th, h_in), lambda b, i: (i, 0)),
            pl.BlockSpec((w_in, w_out), lambda b, i: (0, 0)),
            pl.BlockSpec((1, Q, h_in, w_in), lambda b, i: (b, 0, 0, 0)),
            pl.BlockSpec((1, Q, Cp1), lambda b, i: (b, 0, 0)),
        ],
        out_specs=(
            pl.BlockSpec((1, Q, th, w_out), lambda b, i: (b, 0, i, 0)),
            pl.BlockSpec((1, C, th, w_out), lambda b, i: (b, 0, i, 0)),
        ),
        scratch_shapes=[pltpu.VMEM((Q, C), jnp.bfloat16)],
        compiler_params=pltpu.CompilerParams(
            dimension_semantics=("parallel", "arbitrary"),
            vmem_limit_bytes=_VMEM_LIMIT,
        ),
    )(wh, wwt, mask_pred.astype(jnp.float32), mask_cls.astype(jnp.float32))
    return mask_up, sem


# ----------------------------------------------------------------------------
# YOSO eval-forward (the parts implementable from this file)
# ----------------------------------------------------------------------------
def yoso_forward_eval(images, pixel_mean, pixel_std, cls_scores, mask_preds):
    B, C, H, W = images.shape
    normed = normalize_images(images, pixel_mean, pixel_std)
    # TODO(synk): backbone -> yoso_neck -> yoso_head would consume `normed`;
    # replaced by the supplied synthetic (cls_scores, mask_preds).
    mask_pred_results, sem_segs = upsample_and_semantic_inference(
        cls_scores, mask_preds, H, W)
    return normed, mask_pred_results, sem_segs


if __name__ == "__main__":
    key = jax.random.PRNGKey(0)
    B, C_IMG, H, W = 2, 3, 32, 32        # small padded image batch
    Q, NUM_CLASSES = 8, 4                # proposals, classes (head emits C+1 logits)
    h_feat, w_feat = 8, 8                # head mask resolution before interpolate

    k1, k2, k3 = jax.random.split(key, 3)
    images = jax.random.normal(k1, (B, C_IMG, H, W), jnp.float32) * 50.0 + 100.0
    pixel_mean = jnp.array([123.675, 116.28, 103.53], jnp.float32)
    pixel_std = jnp.array([58.395, 57.12, 57.375], jnp.float32)

    # Deterministic synthetic head outputs (see TODO above).
    cls_scores = jax.random.normal(k2, (B, Q, NUM_CLASSES + 1), jnp.float32)
    mask_preds = jax.random.normal(k3, (B, Q, h_feat, w_feat), jnp.float32)

    normed, mask_up, sem_seg = yoso_forward_eval(
        images, pixel_mean, pixel_std, cls_scores, mask_preds)
    jax.block_until_ready((normed, mask_up, sem_seg))

    # --- reference checks (plain JAX) ---
    norm_ref = (images - pixel_mean[None, :, None, None]) / pixel_std[None, :, None, None]
    Wh = _bilinear_matrix(h_feat, H)
    Ww = _bilinear_matrix(w_feat, W)
    up_ref = jnp.einsum("Hh,bqhw,Ww->bqHW", Wh, mask_preds, Ww)
    probs_ref = jax.nn.softmax(cls_scores, axis=-1)[..., :-1]
    sem_ref = jnp.einsum("bqc,bqhw->bchw", probs_ref, jax.nn.sigmoid(up_ref))

    assert bool(jnp.allclose(normed, norm_ref, atol=1e-4, rtol=1e-4))
    assert bool(jnp.allclose(mask_up, up_ref, atol=5e-2, rtol=5e-2))
    assert bool(jnp.allclose(sem_seg, sem_ref, atol=5e-2, rtol=5e-2))

    print("KERNEL_OK")
</pallas_src>

<mosaic_0001>
module attributes {stable_mosaic.version = 11 : i64} {
  func.func @_normalize_kernel(%arg0: i32, %arg1: memref<6x512xf32, #tpu.memory_space<vmem>>, %arg2: memref<6x1xf32, #tpu.memory_space<vmem>>, %arg3: memref<6x1xf32, #tpu.memory_space<vmem>>, %arg4: memref<6x512xf32, #tpu.memory_space<vmem>>) attributes {dimension_semantics = [#tpu.dimension_semantics<parallel>], iteration_bounds = array<i64: 2>, scalar_prefetch = 0 : i64, scratch_operands = 0 : i64, tpu.core_type = #tpu.core_type<tc>, window_params = [{transform_indices = @transform_0, window_bounds = array<i64: 6, 512>}, {pipeline_mode = #tpu.pipeline_mode<synchronous>, transform_indices = @transform_1, window_bounds = array<i64: 6, 1>}, {pipeline_mode = #tpu.pipeline_mode<synchronous>, transform_indices = @transform_2, window_bounds = array<i64: 6, 1>}, {transform_indices = @transform_3, window_bounds = array<i64: 6, 512>}]} {
    %c0 = arith.constant 0 : index
    %c0_0 = arith.constant 0 : index
    %0 = vector.load %arg1[%c0, %c0_0] : memref<6x512xf32, #tpu.memory_space<vmem>>, vector<6x512xf32>
    %c0_1 = arith.constant 0 : index
    %c0_2 = arith.constant 0 : index
    %1 = vector.load %arg2[%c0_1, %c0_2] : memref<6x1xf32, #tpu.memory_space<vmem>>, vector<6x1xf32>
    %2 = vector.broadcast %1 : vector<6x1xf32> to vector<6x512xf32>
    %3 = arith.subf %0, %2 : vector<6x512xf32>
    %c0_3 = arith.constant 0 : index
    %c0_4 = arith.constant 0 : index
    %4 = vector.load %arg3[%c0_3, %c0_4] : memref<6x1xf32, #tpu.memory_space<vmem>>, vector<6x1xf32>
    %5 = vector.broadcast %4 : vector<6x1xf32> to vector<6x512xf32>
    %6 = arith.mulf %3, %5 : vector<6x512xf32>
    %c0_5 = arith.constant 0 : index
    %c0_6 = arith.constant 0 : index
    %7 = vector.load %arg4[%c0_5, %c0_6] : memref<6x512xf32, #tpu.memory_space<vmem>>, vector<6x512xf32>
    tpu.vector_store %arg4[%c0_5, %c0_6], %6 {strides = array<i32>} : memref<6x512xf32, #tpu.memory_space<vmem>>, vector<6x512xf32>,
    return
  }
  func.func @transform_0(%arg0: i32) -> (i32, i32) {
    %c0_i32 = arith.constant 0 : i32
    %c0_i32_0 = arith.constant 0 : i32
    return %c0_i32, %arg0 : i32, i32
  }
  func.func @transform_1(%arg0: i32) -> (i32, i32) {
    %c0_i32 = arith.constant 0 : i32
    %c0_i32_0 = arith.constant 0 : i32
    %c0_i32_1 = arith.constant 0 : i32
    return %c0_i32, %c0_i32_0 : i32, i32
  }
  func.func @transform_2(%arg0: i32) -> (i32, i32) {
    %c0_i32 = arith.constant 0 : i32
    %c0_i32_0 = arith.constant 0 : i32
    %c0_i32_1 = arith.constant 0 : i32
    return %c0_i32, %c0_i32_0 : i32, i32
  }
  func.func @transform_3(%arg0: i32) -> (i32, i32) {
    %c0_i32 = arith.constant 0 : i32
    %c0_i32_0 = arith.constant 0 : i32
    return %c0_i32, %arg0 : i32, i32
  }
}

</mosaic_0001>

<llo_original>
// kernel: tpu_custom_call.1
$region0: #{tpu_custom_call.1}
  #allocation0 [shape = 'u32[]', space=smem, size = 0x4, offset = 0x4, fixed_abs, tag = 'smem constant byte address 0x4 - core index']
  #allocation1 [shape = 'u32[144,128]{1,0:T(1,128)}', space=vmem, size = 0x12000, scoped, tag = 'internal scratch']
  %s0 = inlined_call_operand.hbm [shape: f32[6,1024], index: 0, kind: input, shape index: {}]
  %s1 = inlined_call_operand.vmem [shape: f32[6,1], index: 1, kind: input, shape index: {}]
  %s2 = inlined_call_operand.vmem [shape: f32[6,1], index: 2, kind: input, shape index: {}]
  %s3 = inlined_call_operand.hbm [shape: f32[6,1024], index: 3, kind: output, shape index: {}]
  %s4 = sld [smem:[#allocation0]]
  $region49: #{tpu_custom_call.1} parent=0
    _
  %s6 = ssub.s32 1, %s4
  %s7 = scalar_select 0, %s6, %s4
  $region1: #{tpu_custom_call.1} parent=0
    #allocation2 [shape = 'u8[32768]{0}', space=vmem, size = 0x8000, scoped, tag = 'input window, operand 0']
    #allocation3 [shape = 's32[2]{0}', space=sflag, size = 0x8, scoped, tag = 'scoped memory for tpu_custom_call.1']
    #allocation4 [shape = 's32[2]{0}', space=sflag, size = 0x8, scoped, tag = 'scoped memory for tpu_custom_call.1']
    #allocation5 [shape = 'u8[32768]{0}', space=vmem, size = 0x8000, scoped, tag = 'output window, operand 0']
    %8 = vsyncpa [#allocation3], 0
    %s9 = scalar_lea.sflag [#allocation3], 1
    %10 = vsyncpa %s9, 0
    %11 = vsyncpa [#allocation4], 0
    %s12 = scalar_lea.sflag [#allocation4], 1
    %13 = vsyncpa %s12, 0
    loop: start=0, step=1, limit=4
    $region2: #{tpu_custom_call.1} parent=1 // loop_pre_header
      _
    $region3: #{tpu_custom_call.1} parent=1 // loop_header
      %s15 = sphi 0, %s19
      %p16 = scmp.ge.s32.totalorder %s15, 4
      %s25 = sphi 0, %s27
      %s28 = sphi 0, %s25
      %s29 = sphi 0, %s28
      %s45 = sphi 0, %s29
      %s49 = sphi 0, %s49
      %s51 = sphi 0, %s49
      %s52 = sphi 0, %s51
      %s66 = sphi 0, %s52
      %s70 = sphi 0, %s70
      %s72 = sphi 0, %s70
      %s73 = sphi 0, %s72
      %s87 = sphi 0, %s73
      %s93 = sphi 0, %s95
      %s96 = sphi 0, %s93
      %s97 = sphi 0, %s96
      %s113 = sphi 0, %s97
    $region4: #{tpu_custom_call.1} parent=1 // loop_header_branch
      %18 = sbr.rel (%p16) target = $region8
    $region5: #{tpu_custom_call.1} parent=1 // loop_body
      %s20 = ssub.s32 %s15, 1
      %s21 = ssub.s32 %s15, 2
      %s22 = sadd.s32 %s15, 1
      %s23 = ssub.s32 %s15, %s22
      %p24 = scmp.eq.s32.totalorder %s23, 0
      %s26 = sadd.s32 %s25, 1
      %s27 = scalar_select %p24, %s25, %s26
      %p30 = pneg %p24
      %p31 = scmp.eq.s32.totalorder %s15, 1
      %p32 = por %p30, %p31
      %p33 = scmp.ne.s32.totalorder %s25, %s28
      %p34 = scmp.eq.s32.totalorder %s15, 0
      %p35 = por %p33, %p34
      %p36 = scmp.ne.s32.totalorder %s25, %s28
      %p37 = scmp.eq.s32.totalorder %s20, 1
      %p38 = por %p36, %p37
      %p39 = scmp.ne.s32.totalorder %s28, %s29
      %p40 = scmp.eq.s32.totalorder %s20, 0
      %p41 = por %p39, %p40
      %p42 = scmp.ne.s32.totalorder %s28, %s29
      %p43 = scmp.eq.s32.totalorder %s21, 1
      %p44 = por %p42, %p43
      %p46 = scmp.ne.s32.totalorder %s29, %s45
      %p47 = scmp.eq.s32.totalorder %s21, 0
      %p48 = por %p46, %p47
      %s50 = sadd.s32 %s49, 1
      %p53 = scmp.eq.s32.totalorder %s15, 1
      %p54 = scmp.ne.s32.totalorder %s49, %s51
      %p55 = scmp.eq.s32.totalorder %s15, 0
      %p56 = por %p54, %p55
      %p57 = scmp.ne.s32.totalorder %s49, %s51
      %p58 = scmp.eq.s32.totalorder %s20, 1
      %p59 = por %p57, %p58
      %p60 = scmp.ne.s32.totalorder %s51, %s52
      %p61 = scmp.eq.s32.totalorder %s20, 0
      %p62 = por %p60, %p61
      %p63 = scmp.ne.s32.totalorder %s51, %s52
      %p64 = scmp.eq.s32.totalorder %s21, 1
      %p65 = por %p63, %p64
      %p67 = scmp.ne.s32.totalorder %s52, %s66
      %p68 = scmp.eq.s32.totalorder %s21, 0
      %p69 = por %p67, %p68
      %s71 = sadd.s32 %s70, 1
      %p74 = scmp.eq.s32.totalorder %s15, 1
      %p75 = scmp.ne.s32.totalorder %s70, %s72
      %p76 = scmp.eq.s32.totalorder %s15, 0
      %p77 = por %p75, %p76
      %p78 = scmp.ne.s32.totalorder %s70, %s72
      %p79 = scmp.eq.s32.totalorder %s20, 1
      %p80 = por %p78, %p79
      %p81 = scmp.ne.s32.totalorder %s72, %s73
      %p82 = scmp.eq.s32.totalorder %s20, 0
      %p83 = por %p81, %p82
      %p84 = scmp.ne.s32.totalorder %s72, %s73
      %p85 = scmp.eq.s32.totalorder %s21, 1
      %p86 = por %p84, %p85
      %p88 = scmp.ne.s32.totalorder %s73, %s87
      %p89 = scmp.eq.s32.totalorder %s21, 0
      %p90 = por %p88, %p89
      %s91 = ssub.s32 %s15, %s22
      %p92 = scmp.eq.s32.totalorder %s91, 0
      %s94 = sadd.s32 %s93, 1
      %s95 = scalar_select %p92, %s93, %s94
      %p98 = pneg %p92
      %p99 = scmp.eq.s32.totalorder %s15, 1
      %p100 = por %p98, %p99
      %p101 = scmp.ne.s32.totalorder %s93, %s96
      %p102 = scmp.eq.s32.totalorder %s15, 0
      %p103 = por %p101, %p102
      %p104 = scmp.ne.s32.totalorder %s93, %s96
      %p105 = scmp.eq.s32.totalorder %s20, 1
      %p106 = por %p104, %p105
      %p107 = scmp.ne.s32.totalorder %s96, %s97
      %p108 = scmp.eq.s32.totalorder %s20, 0
      %p109 = por %p107, %p108
      %p110 = scmp.ne.s32.totalorder %s96, %s97
      %p111 = scmp.eq.s32.totalorder %s21, 1
      %p112 = por %p110, %p111
      %p114 = scmp.ne.s32.totalorder %s97, %s113
      %p115 = scmp.eq.s32.totalorder %s21, 0
      %p116 = por %p114, %p115
      %p117 = scmp.le.s32.totalorder 1, %s15
      %p118 = scmp.lt.s32.totalorder %s15, 3
      %p119 = pnand %p117, %p118
      %p120 = pneg %p119
      // Predicated region
      $region9: #{tpu_custom_call.1} parent=5 // pred_check
        _
      $region10: #{tpu_custom_call.1} parent=5 // pred_check_branch
        %122 = sbr.rel (%p119) target = $region12
      $region11: #{tpu_custom_call.1} parent=5 // pred_region
        %s123 = ssub.s32 %s15, 1
        // Predicated region
        $region13: #{tpu_custom_call.1} parent=11 // pred_check
          %p124 = pneg %p62
        $region14: #{tpu_custom_call.1} parent=11 // pred_check_branch
          %126 = sbr.rel (%p124) target = $region16
        $region15: #{tpu_custom_call.1} parent=11 // pred_region
          _
        $region16: #{tpu_custom_call.1} parent=11 // pred_fallthru
          _
        // Predicated region
        $region17: #{tpu_custom_call.1} parent=11 // pred_check
          %p127 = pneg %p83
        $region18: #{tpu_custom_call.1} parent=11 // pred_check_branch
          %129 = sbr.rel (%p127) target = $region20
        $region19: #{tpu_custom_call.1} parent=11 // pred_region
          _
        $region20: #{tpu_custom_call.1} parent=11 // pred_fallthru
          _
      $region12: #{tpu_custom_call.1} parent=5 // pred_fallthru
        _
      %p130 = scmp.lt.s32.totalorder %s15, 2
      // Predicated region
      $region21: #{tpu_custom_call.1} parent=5 // pred_check
        %p131 = pneg %p130
      $region22: #{tpu_custom_call.1} parent=5 // pred_check_branch
        %133 = sbr.rel (%p131) target = $region24
      $region23: #{tpu_custom_call.1} parent=5 // pred_region
        // Predicated region
        $region25: #{tpu_custom_call.1} parent=23 // pred_check
          %p134 = pneg %p35
        $region26: #{tpu_custom_call.1} parent=23 // pred_check_branch
          %136 = sbr.rel (%p134) target = $region28
        $region27: #{tpu_custom_call.1} parent=23 // pred_region
          %s137 = sand.u32 %s25, 1
          %s138 = scalar_lea.sflag [#allocation3], %s137
          %s139 = sand.u32 %s25, 1
          %s140 = smul.addr %s139, 32
          %s141 = scalar_lea.vmem [#allocation2], %s140
          %s142 = smul.u32 4, %s15
          %s144 = ssub.s32 512, 512
          %145 = vsyncadd %s138, %s144
          %s146 = smul.addr %s142, 128
          %s147 = scalar_lea.hbm %s0, %s146
          %s149 = sshll.u32 %s141, 4
          %s150 = int_to_ptr.vmem [resolvable:$true] %s149
          %152 = dma.hbm_to_vmem [thread:$0]  %s147, 512, %s150, %s138
        $region28: #{tpu_custom_call.1} parent=23 // pred_fallthru
          _
      $region24: #{tpu_custom_call.1} parent=5 // pred_fallthru
        _
      %p153 = scmp.le.s32.totalorder 1, %s15
      %p154 = scmp.lt.s32.totalorder %s15, 3
      %p155 = pnand %p153, %p154
      %p156 = pneg %p155
      // Predicated region
      $region29: #{tpu_custom_call.1} parent=5 // pred_check
        _
      $region30: #{tpu_custom_call.1} parent=5 // pred_check_branch
        %158 = sbr.rel (%p155) target = $region32
      $region31: #{tpu_custom_call.1} parent=5 // pred_region
        %s159 = ssub.s32 %s15, 1
        %s160 = sand.u32 %s28, 1
        %s161 = scalar_lea.sflag [#allocation3], %s160
        %s162 = sand.u32 %s28, 1
        %s163 = smul.addr %s162, 32
        %s164 = scalar_lea.vmem [#allocation2], %s163
        // Predicated region
        $region33: #{tpu_custom_call.1} parent=31 // pred_check
          %p165 = pneg %p41
        $region34: #{tpu_custom_call.1} parent=31 // pred_check_branch
          %167 = sbr.rel (%p165) target = $region36
        $region35: #{tpu_custom_call.1} parent=31 // pred_region
          %168 = dma.done %s161, 512
        $region36: #{tpu_custom_call.1} parent=31 // pred_fallthru
          _
        %s169 = sand.u32 %s28, 1
        %s170 = scalar_lea.sflag [#allocation3], %s169
        %s171 = sand.u32 %s28, 1
        %s172 = smul.addr %s171, 32
        %s173 = scalar_lea.vmem [#allocation2], %s172
        %p174 = pneg %p41
        %p175 = pneg %p38
        %p176 = pneg %p62
        %p177 = pneg %p59
        %p178 = pneg %p83
        %p179 = pneg %p80
        %p180 = pneg %p109
        %p181 = pneg %p106
        %s182 = sand.u32 %s96, 1
        %s183 = scalar_lea.sflag [#allocation4], %s182
        %s184 = sand.u32 %s96, 1
        %s185 = smul.addr %s184, 32
        %s186 = scalar_lea.vmem [#allocation5], %s185
        %s187 = smul.u32 4, %s20
        %s188 = smul.u32 4, %s20
        %v189 = vld [vmem:[%s164] sm:$0x3f]
        %v190 = vld [vmem:[%s164 + $0x8] sm:$0x3f]
        %v191 = vld [vmem:[%s164 + $0x10] sm:$0x3f]
        %v192 = vld [vmem:[%s164 + $0x18] sm:$0x3f]
        %v193 = vld [vmem:[%s1] sm:$0x3f]
        %195 = vset.pattern.permute.xlu0 0
        %196 = vperm.xlu0 %195, %v193
        %v197 = vpop.permute.xlu0 %196
        %v199 = vsub.f32 %v189, %v197
        %v200 = vsub.f32 %v190, %v197
        %v201 = vsub.f32 %v191, %v197
        %v202 = vsub.f32 %v192, %v197
        %v203 = vld [vmem:[%s2] sm:$0x3f]
        %205 = vset.pattern.permute.xlu0 0
        %206 = vperm.xlu0 %205, %v203
        %v207 = vpop.permute.xlu0 %206
        %v209 = vmul.f32 %v199, %v207
        %v210 = vmul.f32 %v200, %v207
        %v211 = vmul.f32 %v201, %v207
        %v212 = vmul.f32 %v202, %v207
        %213 = vst [vmem:[%s186] sm:$0x3f] %v209
        %214 = vst [vmem:[%s186 + $0x8] sm:$0x3f] %v210
        %215 = vst [vmem:[%s186 + $0x10] sm:$0x3f] %v211
        %216 = vst [vmem:[%s186 + $0x18] sm:$0x3f] %v212
        %s217 = sand.u32 %s96, 1
        %s218 = scalar_lea.sflag [#allocation4], %s217
        %s219 = sand.u32 %s96, 1
        %s220 = smul.addr %s219, 32
        %s221 = scalar_lea.vmem [#allocation5], %s220
        // Predicated region
        $region37: #{tpu_custom_call.1} parent=31 // pred_check
          %p222 = pneg %p106
        $region38: #{tpu_custom_call.1} parent=31 // pred_check_branch
          %224 = sbr.rel (%p222) target = $region40
        $region39: #{tpu_custom_call.1} parent=31 // pred_region
          %s225 = smul.u32 4, %s20
          %s227 = ssub.s32 512, 512
          %228 = vsyncadd %s218, %s227
          %s229 = smul.addr %s225, 128
          %s230 = scalar_lea.hbm %s3, %s229
          %s232 = sshll.u32 %s221, 4
          %s233 = int_to_ptr.vmem [resolvable:$true] %s232
          %235 = dma.vmem_to_hbm [thread:$0]  %s233, 512, %s230, %s218
        $region40: #{tpu_custom_call.1} parent=31 // pred_fallthru
          _
      $region32: #{tpu_custom_call.1} parent=5 // pred_fallthru
        _
      %p236 = scmp.le.s32.totalorder 2, %s15
      // Predicated region
      $region41: #{tpu_custom_call.1} parent=5 // pred_check
        %p237 = pneg %p236
      $region42: #{tpu_custom_call.1} parent=5 // pred_check_branch
        %239 = sbr.rel (%p237) target = $region44
      $region43: #{tpu_custom_call.1} parent=5 // pred_region
        %s240 = ssub.s32 %s15, 2
        // Predicated region
        $region45: #{tpu_custom_call.1} parent=43 // pred_check
          %p241 = pneg %p112
        $region46: #{tpu_custom_call.1} parent=43 // pred_check_branch
          %243 = sbr.rel (%p241) target = $region48
        $region47: #{tpu_custom_call.1} parent=43 // pred_region
          %s244 = sand.u32 %s97, 1
          %s245 = scalar_lea.sflag [#allocation4], %s244
          %s246 = sand.u32 %s97, 1
          %s247 = smul.addr %s246, 32
          %s248 = scalar_lea.vmem [#allocation5], %s247
          %249 = dma.done %s245, 512
        $region48: #{tpu_custom_call.1} parent=43 // pred_fallthru
          _
      $region44: #{tpu_custom_call.1} parent=5 // pred_fallthru
        _
    $region6: #{tpu_custom_call.1} parent=1 // loop_footer
      %s19 = sadd.s32 1, %s15
    $region7: #{tpu_custom_call.1} parent=1 // loop_footer_branch
      %14 = sbr.rel target = $region3
    $region8: #{tpu_custom_call.1} parent=1 // loop_exit
      _
    %250 = vsyncpa [#allocation3], 1
    %s251 = scalar_lea.sflag [#allocation3], 1
    %252 = vsyncpa %s251, 1
    %253 = vsyncpa [#allocation4], 1
    %s254 = scalar_lea.sflag [#allocation4], 1
    %255 = vsyncpa %s254, 1

</llo_original>
